<compile_context>
chip_gen: v5e
topology: v5e:2x2
jax: 0.10.0
libtpu: 0.0.40
codegen_flags: <defaults>
</compile_context>

<pallas_src>
import functools

import jax
import jax.numpy as jnp
from jax.experimental import pallas as pl
from jax.experimental.pallas import tpu as pltpu


def _mlp_kernel(x_ref, w1_ref, b1_ref, w2_ref, b2_ref, o_ref):
    # fc1: (tm, C) @ (C, H) on the MXU, f32 accumulation.
    h = jnp.dot(x_ref[...], w1_ref[...], preferred_element_type=jnp.float32)
    h = h + b1_ref[...].astype(jnp.float32)
    # act: ReLU.  (nn.Dropout(p=0.0) in the reference module is the identity.)
    h = jnp.maximum(h, 0.0)
    # fc2: (tm, H) @ (H, Cout).  Cast h to the weight dtype so bf16 weights hit
    # the bf16 MXU path; accumulation stays f32.
    out = jnp.dot(h.astype(w2_ref.dtype), w2_ref[...],
                  preferred_element_type=jnp.float32)
    out = out + b2_ref[...].astype(jnp.float32)
    o_ref[...] = out.astype(o_ref.dtype)


def _round_up(v, m):
    return ((v + m - 1) // m) * m


def _const_spec(shape, weight_buffers):
    """BlockSpec for a grid-invariant operand (weights / biases)."""
    index_map = lambda i: (0, 0)
    if weight_buffers is not None and hasattr(pl, "Buffered"):
        try:
            mode = pl.Buffered(buffer_count=weight_buffers)
            return pl.BlockSpec(shape, index_map, pipeline_mode=mode)
        except TypeError:
            # Older jax without pipeline_mode / Buffered kwarg support.
            pass
    return pl.BlockSpec(shape, index_map)


@functools.partial(jax.jit, static_argnames=("block_m", "weight_buffers"))
def mlp_forward(x, w1, b1, w2, b2, *, block_m=256, weight_buffers=1):
    """Fused MLP forward: relu(x @ w1 + b1) @ w2 + b2.

    x : (..., in_features)
    w1: (in_features, hidden)    b1: (hidden,)
    w2: (hidden, out_features)   b2: (out_features,)
    Returns (..., out_features) in x.dtype.
    """
    orig_shape = x.shape
    in_features = orig_shape[-1]
    hidden = w1.shape[1]
    out_features = w2.shape[1]

    x2d = x.reshape(-1, in_features)
    m = x2d.shape[0]

    # Row tile: multiple of 16 (covers f32 sublane=8 and bf16 packing=16),
    # clamped so small inputs are not padded up to a full 256-row tile.
    tm = _round_up(min(block_m, _round_up(m, 16)), 16)
    grid_m = pl.cdiv(m, tm)
    m_pad = grid_m * tm
    if m_pad != m:
        x2d = jnp.pad(x2d, ((0, m_pad - m), (0, 0)))

    b1_2d = b1.reshape(1, hidden)
    b2_2d = b2.reshape(1, out_features)

    act_bytes = jnp.dtype(x.dtype).itemsize
    w_bytes = jnp.dtype(w1.dtype).itemsize
    flops = 2 * m_pad * (in_features * hidden + hidden * out_features)
    bytes_accessed = (m_pad * (in_features + out_features) * act_bytes
                      + (in_features * hidden + hidden * out_features) * w_bytes
                      + (hidden + out_features) * w_bytes)

    out = pl.pallas_call(
        _mlp_kernel,
        out_shape=jax.ShapeDtypeStruct((m_pad, out_features), x.dtype),
        grid_spec=pltpu.PrefetchScalarGridSpec(
            num_scalar_prefetch=0,
            grid=(grid_m,),
            in_specs=[
                pl.BlockSpec((tm, in_features), lambda i: (i, 0)),
                _const_spec((in_features, hidden), weight_buffers),
                _const_spec((1, hidden), weight_buffers),
                _const_spec((hidden, out_features), weight_buffers),
                _const_spec((1, out_features), weight_buffers),
            ],
            out_specs=pl.BlockSpec((tm, out_features), lambda i: (i, 0)),
        ),
        compiler_params=pltpu.CompilerParams(
            # M tiles are independent -> shard across TensorCores (v7x megacore).
            dimension_semantics=("parallel",),
            # Raise scoped VMEM above the 16/32 MiB default; <= physical on
            # v5e/v6e (128 MiB) and v7x (64 MiB).
            vmem_limit_bytes=64 * 1024 * 1024,
        ),
        cost_estimate=pl.CostEstimate(
            flops=flops, transcendentals=0, bytes_accessed=bytes_accessed),
    )(x2d, w1, b1_2d, w2, b2_2d)

    out = out[:m]
    return out.reshape(*orig_shape[:-1], out_features)


def init_mlp_params(key, in_features, hidden_features, out_features,
                    dtype=jnp.float32):
    """Mimics nn.Linear default init (uniform +-1/sqrt(fan_in)).
    Weights are created PyTorch-style (out, in) then transposed to (in, out)."""
    k1, k2, k3, k4 = jax.random.split(key, 4)
    bound1 = 1.0 / (in_features ** 0.5)
    bound2 = 1.0 / (hidden_features ** 0.5)
    w1_pt = jax.random.uniform(k1, (hidden_features, in_features), dtype,
                               minval=-bound1, maxval=bound1)
    b1 = jax.random.uniform(k2, (hidden_features,), dtype,
                            minval=-bound1, maxval=bound1)
    w2_pt = jax.random.uniform(k3, (out_features, hidden_features), dtype,
                               minval=-bound2, maxval=bound2)
    b2 = jax.random.uniform(k4, (out_features,), dtype,
                            minval=-bound2, maxval=bound2)
    return w1_pt.T, b1, w2_pt.T, b2


if __name__ == "__main__":
    # Small but lane-dense shapes (feature dims are multiples of 128):
    # batch=2, seq=8 tokens, in_features=128, hidden=256, out_features=128.
    B, N, C, H = 2, 8, 128, 256

    key = jax.random.PRNGKey(0)
    kx, kp = jax.random.split(key)
    x = jax.random.normal(kx, (B, N, C), dtype=jnp.float32)
    w1, b1, w2, b2 = init_mlp_params(kp, C, H, C)

    def run(xx, params, **kw):
        try:
            return mlp_forward(xx, *params, **kw)
        except Exception:
            # Fallback for jax builds that reject single-buffered weight specs.
            return mlp_forward(xx, *params, weight_buffers=None, **kw)

    def ref_mlp(xx, w1_, b1_, w2_, b2_):
        x32 = xx.reshape(-1, xx.shape[-1]).astype(jnp.float32)
        h = jnp.maximum(x32 @ w1_.astype(jnp.float32) + b1_.astype(jnp.float32), 0.0)
        o = h @ w2_.astype(jnp.float32) + b2_.astype(jnp.float32)
        return o.reshape(*xx.shape[:-1], w2_.shape[1])

    # 1) f32 path; M=16 rows (tile auto-clamps, no padding needed).
    y = jax.block_until_ready(run(x, (w1, b1, w2, b2)))
    ref = ref_mlp(x, w1, b1, w2, b2)
    assert y.shape == (B, N, C)
    assert jnp.allclose(y, ref, atol=1e-5, rtol=1e-5)

    # 2) Ragged row count (26 rows, tile 16) exercises the cdiv + padding path.
    x_odd = jax.random.normal(kx, (B, 13, C), dtype=jnp.float32)
    y_odd = jax.block_until_ready(run(x_odd, (w1, b1, w2, b2), block_m=16))
    assert jnp.allclose(y_odd, ref_mlp(x_odd, w1, b1, w2, b2),
                        atol=1e-5, rtol=1e-5)

    # 3) bf16 activations + weights (bf16 MXU path, f32 accumulation).
    params_bf16 = tuple(p.astype(jnp.bfloat16) for p in (w1, b1, w2, b2))
    y_bf16 = jax.block_until_ready(run(x.astype(jnp.bfloat16), params_bf16))
    assert jnp.allclose(y_bf16.astype(jnp.float32), ref, atol=1e-1, rtol=1e-1)

    print("KERNEL_OK")
</pallas_src>

<mosaic_0001>
module attributes {stable_mosaic.version = 11 : i64} {
  func.func @_mlp_kernel(%arg0: i32, %arg1: memref<16x128xf32, #tpu.memory_space<vmem>>, %arg2: memref<128x256xf32, #tpu.memory_space<vmem>>, %arg3: memref<1x256xf32, #tpu.memory_space<vmem>>, %arg4: memref<256x128xf32, #tpu.memory_space<vmem>>, %arg5: memref<1x128xf32, #tpu.memory_space<vmem>>, %arg6: memref<16x128xf32, #tpu.memory_space<vmem>>) attributes {dimension_semantics = [#tpu.dimension_semantics<parallel>], iteration_bounds = array<i64: 1>, scalar_prefetch = 0 : i64, scratch_operands = 0 : i64, tpu.core_type = #tpu.core_type<tc>, window_params = [{transform_indices = @transform_0, window_bounds = array<i64: 16, 128>}, {pipeline_mode = #tpu.pipeline_mode<synchronous>, transform_indices = @transform_1, window_bounds = array<i64: 128, 256>}, {pipeline_mode = #tpu.pipeline_mode<synchronous>, transform_indices = @transform_2, window_bounds = array<i64: 1, 256>}, {pipeline_mode = #tpu.pipeline_mode<synchronous>, transform_indices = @transform_3, window_bounds = array<i64: 256, 128>}, {pipeline_mode = #tpu.pipeline_mode<synchronous>, transform_indices = @transform_4, window_bounds = array<i64: 1, 128>}, {transform_indices = @transform_5, window_bounds = array<i64: 16, 128>}]} {
    %c0 = arith.constant 0 : index
    %c0_0 = arith.constant 0 : index
    %0 = vector.load %arg1[%c0, %c0_0] : memref<16x128xf32, #tpu.memory_space<vmem>>, vector<16x128xf32>
    %c0_1 = arith.constant 0 : index
    %c0_2 = arith.constant 0 : index
    %1 = vector.load %arg2[%c0_1, %c0_2] : memref<128x256xf32, #tpu.memory_space<vmem>>, vector<128x256xf32>
    %cst = arith.constant dense<0.000000e+00> : vector<16x256xf32>
    %2 = tpu.matmul %0, %1, %cst {dimension_numbers = #tpu.dot_dimension_numbers<[1], [0], [0], [1], [0, 0, 1, 1], [], []>} : vector<16x128xf32>, vector<128x256xf32>, vector<16x256xf32> -> vector<16x256xf32>
    %c0_3 = arith.constant 0 : index
    %c0_4 = arith.constant 0 : index
    %3 = vector.load %arg3[%c0_3, %c0_4] : memref<1x256xf32, #tpu.memory_space<vmem>>, vector<1x256xf32>
    %4 = vector.broadcast %3 : vector<1x256xf32> to vector<16x256xf32>
    %5 = arith.addf %2, %4 : vector<16x256xf32>
    %cst_5 = arith.constant 0.000000e+00 : f32
    %6 = vector.broadcast %cst_5 : f32 to vector<16x256xf32>
    %7 = arith.maximumf %5, %6 : vector<16x256xf32>
    %c0_6 = arith.constant 0 : index
    %c0_7 = arith.constant 0 : index
    %8 = vector.load %arg4[%c0_6, %c0_7] : memref<256x128xf32, #tpu.memory_space<vmem>>, vector<256x128xf32>
    %cst_8 = arith.constant dense<0.000000e+00> : vector<16x128xf32>
    %9 = tpu.matmul %7, %8, %cst_8 {dimension_numbers = #tpu.dot_dimension_numbers<[1], [0], [0], [1], [0, 0, 1, 1], [], []>} : vector<16x256xf32>, vector<256x128xf32>, vector<16x128xf32> -> vector<16x128xf32>
    %c0_9 = arith.constant 0 : index
    %c0_10 = arith.constant 0 : index
    %10 = vector.load %arg5[%c0_9, %c0_10] : memref<1x128xf32, #tpu.memory_space<vmem>>, vector<1x128xf32>
    %11 = vector.broadcast %10 : vector<1x128xf32> to vector<16x128xf32>
    %12 = arith.addf %9, %11 : vector<16x128xf32>
    %c0_11 = arith.constant 0 : index
    %c0_12 = arith.constant 0 : index
    %13 = vector.load %arg6[%c0_11, %c0_12] : memref<16x128xf32, #tpu.memory_space<vmem>>, vector<16x128xf32>
    tpu.vector_store %arg6[%c0_11, %c0_12], %12 {strides = array<i32>} : memref<16x128xf32, #tpu.memory_space<vmem>>, vector<16x128xf32>,
    return
  }
  func.func @transform_0(%arg0: i32) -> (i32, i32) {
    %c0_i32 = arith.constant 0 : i32
    %c0_i32_0 = arith.constant 0 : i32
    return %arg0, %c0_i32 : i32, i32
  }
  func.func @transform_1(%arg0: i32) -> (i32, i32) {
    %c0_i32 = arith.constant 0 : i32
    %c0_i32_0 = arith.constant 0 : i32
    %c0_i32_1 = arith.constant 0 : i32
    return %c0_i32, %c0_i32_0 : i32, i32
  }
  func.func @transform_2(%arg0: i32) -> (i32, i32) {
    %c0_i32 = arith.constant 0 : i32
    %c0_i32_0 = arith.constant 0 : i32
    %c0_i32_1 = arith.constant 0 : i32
    return %c0_i32, %c0_i32_0 : i32, i32
  }
  func.func @transform_3(%arg0: i32) -> (i32, i32) {
    %c0_i32 = arith.constant 0 : i32
    %c0_i32_0 = arith.constant 0 : i32
    %c0_i32_1 = arith.constant 0 : i32
    return %c0_i32, %c0_i32_0 : i32, i32
  }
  func.func @transform_4(%arg0: i32) -> (i32, i32) {
    %c0_i32 = arith.constant 0 : i32
    %c0_i32_0 = arith.constant 0 : i32
    %c0_i32_1 = arith.constant 0 : i32
    return %c0_i32, %c0_i32_0 : i32, i32
  }
  func.func @transform_5(%arg0: i32) -> (i32, i32) {
    %c0_i32 = arith.constant 0 : i32
    %c0_i32_0 = arith.constant 0 : i32
    return %arg0, %c0_i32 : i32, i32
  }
}

module attributes {stable_mosaic.version = 11 : i64} {
  func.func @_mlp_kernel(%arg0: i32, %arg1: memref<16x128xf32, #tpu.memory_space<vmem>>, %arg2: memref<128x256xf32, #tpu.memory_space<vmem>>, %arg3: memref<1x256xf32, #tpu.memory_space<vmem>>, %arg4: memref<256x128xf32, #tpu.memory_space<vmem>>, %arg5: memref<1x128xf32, #tpu.memory_space<vmem>>, %arg6: memref<16x128xf32, #tpu.memory_space<vmem>>) attributes {dimension_semantics = [#tpu.dimension_semantics<parallel>], iteration_bounds = array<i64: 1>, scalar_prefetch = 0 : i64, scratch_operands = 0 : i64, tpu.core_type = #tpu.core_type<tc>, window_params = [{transform_indices = @transform_0, window_bounds = array<i64: 16, 128>}, {pipeline_mode = #tpu.pipeline_mode<synchronous>, transform_indices = @transform_1, window_bounds = array<i64: 128, 256>}, {pipeline_mode = #tpu.pipeline_mode<synchronous>, transform_indices = @transform_2, window_bounds = array<i64: 1, 256>}, {pipeline_mode = #tpu.pipeline_mode<synchronous>, transform_indices = @transform_3, window_bounds = array<i64: 256, 128>}, {pipeline_mode = #tpu.pipeline_mode<synchronous>, transform_indices = @transform_4, window_bounds = array<i64: 1, 128>}, {transform_indices = @transform_5, window_bounds = array<i64: 16, 128>}]} {
    %c0 = arith.constant 0 : index
    %c0_0 = arith.constant 0 : index
    %0 = vector.load %arg1[%c0, %c0_0] : memref<16x128xf32, #tpu.memory_space<vmem>>, vector<16x128xf32>
    %c0_1 = arith.constant 0 : index
    %c0_2 = arith.constant 0 : index
    %1 = vector.load %arg2[%c0_1, %c0_2] : memref<128x256xf32, #tpu.memory_space<vmem>>, vector<128x256xf32>
    %cst = arith.constant dense<0.000000e+00> : vector<16x256xf32>
    %2 = tpu.matmul %0, %1, %cst {dimension_numbers = #tpu.dot_dimension_numbers<[1], [0], [0], [1], [0, 0, 1, 1], [], []>} : vector<16x128xf32>, vector<128x256xf32>, vector<16x256xf32> -> vector<16x256xf32>
    %c0_3 = arith.constant 0 : index
    %c0_4 = arith.constant 0 : index
    %3 = vector.load %arg3[%c0_3, %c0_4] : memref<1x256xf32, #tpu.memory_space<vmem>>, vector<1x256xf32>
    %4 = vector.broadcast %3 : vector<1x256xf32> to vector<16x256xf32>
    %5 = arith.addf %2, %4 : vector<16x256xf32>
    %cst_5 = arith.constant 0.000000e+00 : f32
    %6 = vector.broadcast %cst_5 : f32 to vector<16x256xf32>
    %7 = arith.maximumf %5, %6 : vector<16x256xf32>
    %c0_6 = arith.constant 0 : index
    %c0_7 = arith.constant 0 : index
    %8 = vector.load %arg4[%c0_6, %c0_7] : memref<256x128xf32, #tpu.memory_space<vmem>>, vector<256x128xf32>
    %cst_8 = arith.constant dense<0.000000e+00> : vector<16x128xf32>
    %9 = tpu.matmul %7, %8, %cst_8 {dimension_numbers = #tpu.dot_dimension_numbers<[1], [0], [0], [1], [0, 0, 1, 1], [], []>} : vector<16x256xf32>, vector<256x128xf32>, vector<16x128xf32> -> vector<16x128xf32>
    %c0_9 = arith.constant 0 : index
    %c0_10 = arith.constant 0 : index
    %10 = vector.load %arg5[%c0_9, %c0_10] : memref<1x128xf32, #tpu.memory_space<vmem>>, vector<1x128xf32>
    %11 = vector.broadcast %10 : vector<1x128xf32> to vector<16x128xf32>
    %12 = arith.addf %9, %11 : vector<16x128xf32>
    %c0_11 = arith.constant 0 : index
    %c0_12 = arith.constant 0 : index
    %13 = vector.load %arg6[%c0_11, %c0_12] : memref<16x128xf32, #tpu.memory_space<vmem>>, vector<16x128xf32>
    tpu.vector_store %arg6[%c0_11, %c0_12], %12 {strides = array<i32>} : memref<16x128xf32, #tpu.memory_space<vmem>>, vector<16x128xf32>,
    return
  }
  func.func @transform_0(%arg0: i32) -> (i32, i32) {
    %c0_i32 = arith.constant 0 : i32
    %c0_i32_0 = arith.constant 0 : i32
    return %arg0, %c0_i32 : i32, i32
  }
  func.func @transform_1(%arg0: i32) -> (i32, i32) {
    %c0_i32 = arith.constant 0 : i32
    %c0_i32_0 = arith.constant 0 : i32
    %c0_i32_1 = arith.constant 0 : i32
    return %c0_i32, %c0_i32_0 : i32, i32
  }
  func.func @transform_2(%arg0: i32) -> (i32, i32) {
    %c0_i32 = arith.constant 0 : i32
    %c0_i32_0 = arith.constant 0 : i32
    %c0_i32_1 = arith.constant 0 : i32
    return %c0_i32, %c0_i32_0 : i32, i32
  }
  func.func @transform_3(%arg0: i32) -> (i32, i32) {
    %c0_i32 = arith.constant 0 : i32
    %c0_i32_0 = arith.constant 0 : i32
    %c0_i32_1 = arith.constant 0 : i32
    return %c0_i32, %c0_i32_0 : i32, i32
  }
  func.func @transform_4(%arg0: i32) -> (i32, i32) {
    %c0_i32 = arith.constant 0 : i32
    %c0_i32_0 = arith.constant 0 : i32
    %c0_i32_1 = arith.constant 0 : i32
    return %c0_i32, %c0_i32_0 : i32, i32
  }
  func.func @transform_5(%arg0: i32) -> (i32, i32) {
    %c0_i32 = arith.constant 0 : i32
    %c0_i32_0 = arith.constant 0 : i32
    return %arg0, %c0_i32 : i32, i32
  }
}

</mosaic_0001>

<llo_original>
// kernel: mlp_forward.1
$region0: #{mlp_forward.1}
  #allocation0 [shape = 'u32[]', space=smem, size = 0x4, offset = 0x4, fixed_abs, tag = 'smem constant byte address 0x4 - core index']
  #allocation1 [shape = 'u32[72,128]{1,0:T(1,128)}', space=vmem, size = 0x9000, scoped, tag = 'internal scratch']
  %s0 = inlined_call_operand.hbm [shape: f32[16,128], index: 0, kind: input, shape index: {}]
  %s1 = inlined_call_operand.hbm [shape: f32[128,256], index: 1, kind: input, shape index: {}]
  %s2 = inlined_call_operand.vmem [shape: f32[1,256], index: 2, kind: input, shape index: {}]
  %s3 = inlined_call_operand.hbm [shape: f32[256,128], index: 3, kind: input, shape index: {}]
  %s4 = inlined_call_operand.vmem [shape: f32[1,128], index: 4, kind: input, shape index: {}]
  %s5 = inlined_call_operand.hbm [shape: f32[16,128], index: 5, kind: output, shape index: {}]
  %s6 = sld [smem:[#allocation0]]
  $region42: #{mlp_forward.1} parent=0
    _
  %s8 = ssub.s32 1, %s6
  %s9 = scalar_select 0, %s8, %s6
  $region1: #{mlp_forward.1} parent=0
    #allocation2 [shape = 'u8[8192]{0}', space=vmem, size = 0x2000, scoped, tag = 'input window, operand 0, single buffered']
    #allocation3 [shape = 's32[1]{0}', space=sflag, size = 0x4, scoped, tag = 'scoped memory for mlp_forward.1']
    #allocation4 [shape = 's32[1]{0}', space=sflag, size = 0x4, scoped, tag = 'scoped memory for mlp_forward.1']
    #allocation5 [shape = 'u8[131072]{0}', space=vmem, size = 0x20000, scoped, tag = 'input window, operand 1, single buffered']
    #allocation6 [shape = 's32[1]{0}', space=sflag, size = 0x4, scoped, tag = 'scoped memory for mlp_forward.1']
    #allocation7 [shape = 'u8[131072]{0}', space=vmem, size = 0x20000, scoped, tag = 'input window, operand 3, single buffered']
    #allocation8 [shape = 'u8[8192]{0}', space=vmem, size = 0x2000, scoped, tag = 'output window, operand 0, single buffered']
    %10 = vsyncpa [#allocation3], 0
    %11 = vsyncpa [#allocation6], 0
    %12 = vsyncpa [#allocation4], 0
    // Predicated region
    $region2: #{mlp_forward.1} parent=1 // pred_check
      _
    $region3: #{mlp_forward.1} parent=1 // pred_check_branch
      %14 = sbr.rel (0) target = $region5
    $region4: #{mlp_forward.1} parent=1 // pred_region
      %16 = vsyncadd [#allocation3], 0
      %s17 = sshll.u32 %s0, 4
      %s18 = int_to_ptr.hbm [resolvable:$true] %s17
      %s19 = sshll.u32 [#allocation2], 4
      %s20 = int_to_ptr.vmem [resolvable:$true] %s19
      %25 = dma.hbm_to_vmem [thread:$0]  %s18, 256, %s20, [#allocation3], 128, 128, 8
    $region5: #{mlp_forward.1} parent=1 // pred_fallthru
      _
    // Predicated region
    $region6: #{mlp_forward.1} parent=1 // pred_check
      _
    $region7: #{mlp_forward.1} parent=1 // pred_check_branch
      %27 = sbr.rel (0) target = $region9
    $region8: #{mlp_forward.1} parent=1 // pred_region
      %29 = vsyncadd [#allocation6], 0
      %s30 = sshll.u32 %s1, 4
      %s31 = int_to_ptr.hbm [resolvable:$true] %s30
      %s32 = sshll.u32 [#allocation5], 4
      %s33 = int_to_ptr.vmem [resolvable:$true] %s32
      %38 = dma.hbm_to_vmem [thread:$0]  %s31, 4096, %s33, [#allocation6], 256, 256, 16
    $region9: #{mlp_forward.1} parent=1 // pred_fallthru
      _
    // Predicated region
    $region10: #{mlp_forward.1} parent=1 // pred_check
      _
    $region11: #{mlp_forward.1} parent=1 // pred_check_branch
      %40 = sbr.rel (0) target = $region13
    $region12: #{mlp_forward.1} parent=1 // pred_region
      _
    $region13: #{mlp_forward.1} parent=1 // pred_fallthru
      _
    // Predicated region
    $region14: #{mlp_forward.1} parent=1 // pred_check
      _
    $region15: #{mlp_forward.1} parent=1 // pred_check_branch
      %42 = sbr.rel (0) target = $region17
    $region16: #{mlp_forward.1} parent=1 // pred_region
      %44 = vsyncadd [#allocation6], 0
      %s45 = sshll.u32 %s3, 4
      %s46 = int_to_ptr.hbm [resolvable:$true] %s45
      %s47 = sshll.u32 [#allocation7], 4
      %s48 = int_to_ptr.vmem [resolvable:$true] %s47
      %53 = dma.hbm_to_vmem [thread:$0]  %s46, 4096, %s48, [#allocation6], 128, 128, 8
    $region17: #{mlp_forward.1} parent=1 // pred_fallthru
      _
    // Predicated region
    $region18: #{mlp_forward.1} parent=1 // pred_check
      _
    $region19: #{mlp_forward.1} parent=1 // pred_check_branch
      %55 = sbr.rel (0) target = $region21
    $region20: #{mlp_forward.1} parent=1 // pred_region
      _
    $region21: #{mlp_forward.1} parent=1 // pred_fallthru
      _
    // Predicated region
    $region22: #{mlp_forward.1} parent=1 // pred_check
      _
    $region23: #{mlp_forward.1} parent=1 // pred_check_branch
      %57 = sbr.rel (0) target = $region25
    $region24: #{mlp_forward.1} parent=1 // pred_region
      %59 = dma.done [#allocation3], 256
    $region25: #{mlp_forward.1} parent=1 // pred_fallthru
      _
    // Predicated region
    $region26: #{mlp_forward.1} parent=1 // pred_check
      _
    $region27: #{mlp_forward.1} parent=1 // pred_check_branch
      %61 = sbr.rel (0) target = $region29
    $region28: #{mlp_forward.1} parent=1 // pred_region
      %63 = dma.done [#allocation6], 4096
    $region29: #{mlp_forward.1} parent=1 // pred_fallthru
      _
    // Predicated region
    $region30: #{mlp_forward.1} parent=1 // pred_check
      _
    $region31: #{mlp_forward.1} parent=1 // pred_check_branch
      %65 = sbr.rel (0) target = $region33
    $region32: #{mlp_forward.1} parent=1 // pred_region
      %67 = dma.done [#allocation6], 4096
    $region33: #{mlp_forward.1} parent=1 // pred_fallthru
      _
    %v68 = vld [vmem:[#allocation2] sm:$0xff]
    %v69 = vld [vmem:[#allocation2 + $0x8] sm:$0xff]
    %v70 = vld [vmem:[#allocation5] sm:$0xff]
    %v71 = vld [vmem:[#allocation5 + $0x8] sm:$0xff]
    %v72 = vld [vmem:[#allocation5 + $0x10] sm:$0xff]
    %v73 = vld [vmem:[#allocation5 + $0x18] sm:$0xff]
    %v74 = vld [vmem:[#allocation5 + $0x20] sm:$0xff]
    %v75 = vld [vmem:[#allocation5 + $0x28] sm:$0xff]
    %v76 = vld [vmem:[#allocation5 + $0x30] sm:$0xff]
    %v77 = vld [vmem:[#allocation5 + $0x38] sm:$0xff]
    %v78 = vld [vmem:[#allocation5 + $0x40] sm:$0xff]
    %v79 = vld [vmem:[#allocation5 + $0x48] sm:$0xff]
    %v80 = vld [vmem:[#allocation5 + $0x50] sm:$0xff]
    %v81 = vld [vmem:[#allocation5 + $0x58] sm:$0xff]
    %v82 = vld [vmem:[#allocation5 + $0x60] sm:$0xff]
    %v83 = vld [vmem:[#allocation5 + $0x68] sm:$0xff]
    %v84 = vld [vmem:[#allocation5 + $0x70] sm:$0xff]
    %v85 = vld [vmem:[#allocation5 + $0x78] sm:$0xff]
    %v86 = vld [vmem:[#allocation5 + $0x80] sm:$0xff]
    %v87 = vld [vmem:[#allocation5 + $0x88] sm:$0xff]
    %v88 = vld [vmem:[#allocation5 + $0x90] sm:$0xff]
    %v89 = vld [vmem:[#allocation5 + $0x98] sm:$0xff]
    %v90 = vld [vmem:[#allocation5 + $0xa0] sm:$0xff]
    %v91 = vld [vmem:[#allocation5 + $0xa8] sm:$0xff]
    %v92 = vld [vmem:[#allocation5 + $0xb0] sm:$0xff]
    %v93 = vld [vmem:[#allocation5 + $0xb8] sm:$0xff]
    %v94 = vld [vmem:[#allocation5 + $0xc0] sm:$0xff]
    %v95 = vld [vmem:[#allocation5 + $0xc8] sm:$0xff]
    %v96 = vld [vmem:[#allocation5 + $0xd0] sm:$0xff]
    %v97 = vld [vmem:[#allocation5 + $0xd8] sm:$0xff]
    %v98 = vld [vmem:[#allocation5 + $0xe0] sm:$0xff]
    %v99 = vld [vmem:[#allocation5 + $0xe8] sm:$0xff]
    %v100 = vld [vmem:[#allocation5 + $0xf0] sm:$0xff]
    %v101 = vld [vmem:[#allocation5 + $0xf8] sm:$0xff]
    %v102 = vld [vmem:[%s2] sm:$0x3]
    %v104 = vperm.slane %v102, 0
    %v105 = vperm.slane %v102, 1
    %108 = vmatpush.msra.mxu0 %v100
    %109 = vmatpush.msra.mxu0 %v98
    %110 = vmatpush.msra.mxu0 %v96
    %111 = vmatpush.msra.mxu0 %v94
    %112 = vmatpush.msra.mxu0 %v92
    %113 = vmatpush.msra.mxu0 %v90
    %114 = vmatpush.msra.mxu0 %v88
    %115 = vmatpush.msra.mxu0 %v86
    %116 = vmatpush.msra.mxu0 %v84
    %117 = vmatpush.msra.mxu0 %v82
    %118 = vmatpush.msra.mxu0 %v80
    %119 = vmatpush.msra.mxu0 %v78
    %120 = vmatpush.msra.mxu0 %v76
    %121 = vmatpush.msra.mxu0 %v74
    %122 = vmatpush.msra.mxu0 %v72
    %123 = vmatpush.msra.mxu0 %v70
    %124 = vmatmul.f32.gmra.mxu0 %v68
    %v125 = vpop.f32.mrf.mxu0
    %v126 = vadd.f32 %v104, %v125
    %127 = vmatmul.f32.gmra.mxu0 %v69
    %v128 = vpop.f32.mrf.mxu0
    %v129 = vadd.f32 %v104, %v128
    %130 = vdwg.mxu0
    %131 = vmatpush.msra.mxu0 %v101
    %132 = vmatpush.msra.mxu0 %v99
    %133 = vmatpush.msra.mxu0 %v97
    %134 = vmatpush.msra.mxu0 %v95
    %135 = vmatpush.msra.mxu0 %v93
    %136 = vmatpush.msra.mxu0 %v91
    %137 = vmatpush.msra.mxu0 %v89
    %138 = vmatpush.msra.mxu0 %v87
    %139 = vmatpush.msra.mxu0 %v85
    %140 = vmatpush.msra.mxu0 %v83
    %141 = vmatpush.msra.mxu0 %v81
    %142 = vmatpush.msra.mxu0 %v79
    %143 = vmatpush.msra.mxu0 %v77
    %144 = vmatpush.msra.mxu0 %v75
    %145 = vmatpush.msra.mxu0 %v73
    %146 = vmatpush.msra.mxu0 %v71
    %147 = vmatmul.f32.gmra.mxu0 %v68
    %v148 = vpop.f32.mrf.mxu0
    %v149 = vadd.f32 %v105, %v148
    %150 = vmatmul.f32.gmra.mxu0 %v69
    %v151 = vpop.f32.mrf.mxu0
    %v152 = vadd.f32 %v105, %v151
    %153 = vdwg.mxu0
    %v154 = vmax.f32 %v126, 0.0
    %v155 = vmax.f32 %v149, 0.0
    %v156 = vmax.f32 %v129, 0.0
    %v157 = vmax.f32 %v152, 0.0
    %v158 = vld [vmem:[#allocation7] sm:$0xff]
    %v159 = vld [vmem:[#allocation7 + $0x8] sm:$0xff]
    %v160 = vld [vmem:[#allocation7 + $0x10] sm:$0xff]
    %v161 = vld [vmem:[#allocation7 + $0x18] sm:$0xff]
    %v162 = vld [vmem:[#allocation7 + $0x20] sm:$0xff]
    %v163 = vld [vmem:[#allocation7 + $0x28] sm:$0xff]
    %v164 = vld [vmem:[#allocation7 + $0x30] sm:$0xff]
    %v165 = vld [vmem:[#allocation7 + $0x38] sm:$0xff]
    %v166 = vld [vmem:[#allocation7 + $0x40] sm:$0xff]
    %v167 = vld [vmem:[#allocation7 + $0x48] sm:$0xff]
    %v168 = vld [vmem:[#allocation7 + $0x50] sm:$0xff]
    %v169 = vld [vmem:[#allocation7 + $0x58] sm:$0xff]
    %v170 = vld [vmem:[#allocation7 + $0x60] sm:$0xff]
    %v171 = vld [vmem:[#allocation7 + $0x68] sm:$0xff]
    %v172 = vld [vmem:[#allocation7 + $0x70] sm:$0xff]
    %v173 = vld [vmem:[#allocation7 + $0x78] sm:$0xff]
    %v174 = vld [vmem:[#allocation7 + $0x80] sm:$0xff]
    %v175 = vld [vmem:[#allocation7 + $0x88] sm:$0xff]
    %v176 = vld [vmem:[#allocation7 + $0x90] sm:$0xff]
    %v177 = vld [vmem:[#allocation7 + $0x98] sm:$0xff]
    %v178 = vld [vmem:[#allocation7 + $0xa0] sm:$0xff]
    %v179 = vld [vmem:[#allocation7 + $0xa8] sm:$0xff]
    %v180 = vld [vmem:[#allocation7 + $0xb0] sm:$0xff]
    %v181 = vld [vmem:[#allocation7 + $0xb8] sm:$0xff]
    %v182 = vld [vmem:[#allocation7 + $0xc0] sm:$0xff]
    %v183 = vld [vmem:[#allocation7 + $0xc8] sm:$0xff]
    %v184 = vld [vmem:[#allocation7 + $0xd0] sm:$0xff]
    %v185 = vld [vmem:[#allocation7 + $0xd8] sm:$0xff]
    %v186 = vld [vmem:[#allocation7 + $0xe0] sm:$0xff]
    %v187 = vld [vmem:[#allocation7 + $0xe8] sm:$0xff]
    %v188 = vld [vmem:[#allocation7 + $0xf0] sm:$0xff]
    %v189 = vld [vmem:[#allocation7 + $0xf8] sm:$0xff]
    %v190 = vld [vmem:[%s4] sm:$0x1]
    %v192 = vperm.slane %v190, 0
    %194 = vmatpush.msra.mxu0 %v173
    %195 = vmatpush.msra.mxu0 %v172
    %196 = vmatpush.msra.mxu0 %v171
    %197 = vmatpush.msra.mxu0 %v170
    %198 = vmatpush.msra.mxu0 %v169
    %199 = vmatpush.msra.mxu0 %v168
    %200 = vmatpush.msra.mxu0 %v167
    %201 = vmatpush.msra.mxu0 %v166
    %202 = vmatpush.msra.mxu0 %v165
    %203 = vmatpush.msra.mxu0 %v164
    %204 = vmatpush.msra.mxu0 %v163
    %205 = vmatpush.msra.mxu0 %v162
    %206 = vmatpush.msra.mxu0 %v161
    %207 = vmatpush.msra.mxu0 %v160
    %208 = vmatpush.msra.mxu0 %v159
    %209 = vmatpush.msra.mxu0 %v158
    %210 = vmatmul.f32.gmra.mxu0 %v154
    %v211 = vpop.f32.mrf.mxu0
    %v212 = vadd.f32 %v192, %v211
    %213 = vmatmul.f32.gmra.mxu0 %v156
    %v214 = vpop.f32.mrf.mxu0
    %v215 = vadd.f32 %v192, %v214
    %216 = vdwg.mxu0
    %217 = vmatpush.msra.mxu0 %v189
    %218 = vmatpush.msra.mxu0 %v188
    %219 = vmatpush.msra.mxu0 %v187
    %220 = vmatpush.msra.mxu0 %v186
    %221 = vmatpush.msra.mxu0 %v185
    %222 = vmatpush.msra.mxu0 %v184
    %223 = vmatpush.msra.mxu0 %v183
    %224 = vmatpush.msra.mxu0 %v182
    %225 = vmatpush.msra.mxu0 %v181
    %226 = vmatpush.msra.mxu0 %v180
    %227 = vmatpush.msra.mxu0 %v179
    %228 = vmatpush.msra.mxu0 %v178
    %229 = vmatpush.msra.mxu0 %v177
    %230 = vmatpush.msra.mxu0 %v176
    %231 = vmatpush.msra.mxu0 %v175
    %232 = vmatpush.msra.mxu0 %v174
    %233 = vmatmul.f32.gmra.mxu0 %v155
    %v234 = vpop.f32.mrf.mxu0
    %v235 = vadd.f32 %v212, %v234
    %236 = vmatmul.f32.gmra.mxu0 %v157
    %v237 = vpop.f32.mrf.mxu0
    %v238 = vadd.f32 %v215, %v237
    %239 = vdwg.mxu0
    %240 = vst [vmem:[#allocation8] sm:$0xff] %v235
    %241 = vst [vmem:[#allocation8 + $0x8] sm:$0xff] %v238
    // Predicated region
    $region34: #{mlp_forward.1} parent=1 // pred_check
      _
    $region35: #{mlp_forward.1} parent=1 // pred_check_branch
      %243 = sbr.rel (0) target = $region37
    $region36: #{mlp_forward.1} parent=1 // pred_region
      %245 = vsyncadd [#allocation4], 0
      %s246 = sshll.u32 [#allocation8], 4
      %s247 = int_to_ptr.vmem [resolvable:$true] %s246
      %s248 = sshll.u32 %s5, 4
      %s249 = int_to_ptr.hbm [resolvable:$true] %s248
      %254 = dma.vmem_to_hbm [thread:$0]  %s247, 256, %s249, [#allocation4], 128, 128, 8
    $region37: #{mlp_forward.1} parent=1 // pred_fallthru
      _
    // Predicated region
    $region38: #{mlp_forward.1} parent=1 // pred_check
      _
    $region39: #{mlp_forward.1} parent=1 // pred_check_branch
      %256 = sbr.rel (0) target = $region41
    $region40: #{mlp_forward.1} parent=1 // pred_region
      %258 = dma.done [#allocation4], 256
    $region41: #{mlp_forward.1} parent=1 // pred_fallthru
      _
    %259 = vsyncpa [#allocation3], 1
    %260 = vsyncpa [#allocation6], 1
    %261 = vsyncpa [#allocation4], 1

// kernel: mlp_forward.1
$region0: #{mlp_forward.1}
  #allocation0 [shape = 'u32[]', space=smem, size = 0x4, offset = 0x4, fixed_abs, tag = 'smem constant byte address 0x4 - core index']
  #allocation1 [shape = 'u32[72,128]{1,0:T(1,128)}', space=vmem, size = 0x9000, scoped, tag = 'internal scratch']
  %s0 = inlined_call_operand.hbm [shape: f32[16,128], index: 0, kind: input, shape index: {}]
  %s1 = inlined_call_operand.hbm [shape: f32[128,256], index: 1, kind: input, shape index: {}]
  %s2 = inlined_call_operand.vmem [shape: f32[1,256], index: 2, kind: input, shape index: {}]
  %s3 = inlined_call_operand.hbm [shape: f32[256,128], index: 3, kind: input, shape index: {}]
  %s4 = inlined_call_operand.vmem [shape: f32[1,128], index: 4, kind: input, shape index: {}]
  %s5 = inlined_call_operand.hbm [shape: f32[16,128], index: 5, kind: output, shape index: {}]
  %s6 = sld [smem:[#allocation0]]
  $region42: #{mlp_forward.1} parent=0
    _
  %s8 = ssub.s32 1, %s6
  %s9 = scalar_select 0, %s8, %s6
  $region1: #{mlp_forward.1} parent=0
    #allocation2 [shape = 'u8[8192]{0}', space=vmem, size = 0x2000, scoped, tag = 'input window, operand 0, single buffered']
    #allocation3 [shape = 's32[1]{0}', space=sflag, size = 0x4, scoped, tag = 'scoped memory for mlp_forward.1']
    #allocation4 [shape = 's32[1]{0}', space=sflag, size = 0x4, scoped, tag = 'scoped memory for mlp_forward.1']
    #allocation5 [shape = 'u8[131072]{0}', space=vmem, size = 0x20000, scoped, tag = 'input window, operand 1, single buffered']
    #allocation6 [shape = 's32[1]{0}', space=sflag, size = 0x4, scoped, tag = 'scoped memory for mlp_forward.1']
    #allocation7 [shape = 'u8[131072]{0}', space=vmem, size = 0x20000, scoped, tag = 'input window, operand 3, single buffered']
    #allocation8 [shape = 'u8[8192]{0}', space=vmem, size = 0x2000, scoped, tag = 'output window, operand 0, single buffered']
    %10 = vsyncpa [#allocation3], 0
    %11 = vsyncpa [#allocation6], 0
    %12 = vsyncpa [#allocation4], 0
    // Predicated region
    $region2: #{mlp_forward.1} parent=1 // pred_check
      _
    $region3: #{mlp_forward.1} parent=1 // pred_check_branch
      %14 = sbr.rel (0) target = $region5
    $region4: #{mlp_forward.1} parent=1 // pred_region
      %16 = vsyncadd [#allocation3], 0
      %s17 = sshll.u32 %s0, 4
      %s18 = int_to_ptr.hbm [resolvable:$true] %s17
      %s19 = sshll.u32 [#allocation2], 4
      %s20 = int_to_ptr.vmem [resolvable:$true] %s19
      %25 = dma.hbm_to_vmem [thread:$0]  %s18, 256, %s20, [#allocation3], 128, 128, 8
    $region5: #{mlp_forward.1} parent=1 // pred_fallthru
      _
    // Predicated region
    $region6: #{mlp_forward.1} parent=1 // pred_check
      _
    $region7: #{mlp_forward.1} parent=1 // pred_check_branch
      %27 = sbr.rel (0) target = $region9
    $region8: #{mlp_forward.1} parent=1 // pred_region
      %29 = vsyncadd [#allocation6], 0
      %s30 = sshll.u32 %s1, 4
      %s31 = int_to_ptr.hbm [resolvable:$true] %s30
      %s32 = sshll.u32 [#allocation5], 4
      %s33 = int_to_ptr.vmem [resolvable:$true] %s32
      %38 = dma.hbm_to_vmem [thread:$0]  %s31, 4096, %s33, [#allocation6], 256, 256, 16
    $region9: #{mlp_forward.1} parent=1 // pred_fallthru
      _
    // Predicated region
    $region10: #{mlp_forward.1} parent=1 // pred_check
      _
    $region11: #{mlp_forward.1} parent=1 // pred_check_branch
      %40 = sbr.rel (0) target = $region13
    $region12: #{mlp_forward.1} parent=1 // pred_region
      _
    $region13: #{mlp_forward.1} parent=1 // pred_fallthru
      _
    // Predicated region
    $region14: #{mlp_forward.1} parent=1 // pred_check
      _
    $region15: #{mlp_forward.1} parent=1 // pred_check_branch
      %42 = sbr.rel (0) target = $region17
    $region16: #{mlp_forward.1} parent=1 // pred_region
      %44 = vsyncadd [#allocation6], 0
      %s45 = sshll.u32 %s3, 4
      %s46 = int_to_ptr.hbm [resolvable:$true] %s45
      %s47 = sshll.u32 [#allocation7], 4
      %s48 = int_to_ptr.vmem [resolvable:$true] %s47
      %53 = dma.hbm_to_vmem [thread:$0]  %s46, 4096, %s48, [#allocation6], 128, 128, 8
    $region17: #{mlp_forward.1} parent=1 // pred_fallthru
      _
    // Predicated region
    $region18: #{mlp_forward.1} parent=1 // pred_check
      _
    $region19: #{mlp_forward.1} parent=1 // pred_check_branch
      %55 = sbr.rel (0) target = $region21
    $region20: #{mlp_forward.1} parent=1 // pred_region
      _
    $region21: #{mlp_forward.1} parent=1 // pred_fallthru
      _
    // Predicated region
    $region22: #{mlp_forward.1} parent=1 // pred_check
      _
    $region23: #{mlp_forward.1} parent=1 // pred_check_branch
      %57 = sbr.rel (0) target = $region25
    $region24: #{mlp_forward.1} parent=1 // pred_region
      %59 = dma.done [#allocation3], 256
    $region25: #{mlp_forward.1} parent=1 // pred_fallthru
      _
    // Predicated region
    $region26: #{mlp_forward.1} parent=1 // pred_check
      _
    $region27: #{mlp_forward.1} parent=1 // pred_check_branch
      %61 = sbr.rel (0) target = $region29
    $region28: #{mlp_forward.1} parent=1 // pred_region
      %63 = dma.done [#allocation6], 4096
    $region29: #{mlp_forward.1} parent=1 // pred_fallthru
      _
    // Predicated region
    $region30: #{mlp_forward.1} parent=1 // pred_check
      _
    $region31: #{mlp_forward.1} parent=1 // pred_check_branch
      %65 = sbr.rel (0) target = $region33
    $region32: #{mlp_forward.1} parent=1 // pred_region
      %67 = dma.done [#allocation6], 4096
    $region33: #{mlp_forward.1} parent=1 // pred_fallthru
      _
    %v68 = vld [vmem:[#allocation2] sm:$0xff]
    %v69 = vld [vmem:[#allocation2 + $0x8] sm:$0xff]
    %v70 = vld [vmem:[#allocation5] sm:$0xff]
    %v71 = vld [vmem:[#allocation5 + $0x8] sm:$0xff]
    %v72 = vld [vmem:[#allocation5 + $0x10] sm:$0xff]
    %v73 = vld [vmem:[#allocation5 + $0x18] sm:$0xff]
    %v74 = vld [vmem:[#allocation5 + $0x20] sm:$0xff]
    %v75 = vld [vmem:[#allocation5 + $0x28] sm:$0xff]
    %v76 = vld [vmem:[#allocation5 + $0x30] sm:$0xff]
    %v77 = vld [vmem:[#allocation5 + $0x38] sm:$0xff]
    %v78 = vld [vmem:[#allocation5 + $0x40] sm:$0xff]
    %v79 = vld [vmem:[#allocation5 + $0x48] sm:$0xff]
    %v80 = vld [vmem:[#allocation5 + $0x50] sm:$0xff]
    %v81 = vld [vmem:[#allocation5 + $0x58] sm:$0xff]
    %v82 = vld [vmem:[#allocation5 + $0x60] sm:$0xff]
    %v83 = vld [vmem:[#allocation5 + $0x68] sm:$0xff]
    %v84 = vld [vmem:[#allocation5 + $0x70] sm:$0xff]
    %v85 = vld [vmem:[#allocation5 + $0x78] sm:$0xff]
    %v86 = vld [vmem:[#allocation5 + $0x80] sm:$0xff]
    %v87 = vld [vmem:[#allocation5 + $0x88] sm:$0xff]
    %v88 = vld [vmem:[#allocation5 + $0x90] sm:$0xff]
    %v89 = vld [vmem:[#allocation5 + $0x98] sm:$0xff]
    %v90 = vld [vmem:[#allocation5 + $0xa0] sm:$0xff]
    %v91 = vld [vmem:[#allocation5 + $0xa8] sm:$0xff]
    %v92 = vld [vmem:[#allocation5 + $0xb0] sm:$0xff]
    %v93 = vld [vmem:[#allocation5 + $0xb8] sm:$0xff]
    %v94 = vld [vmem:[#allocation5 + $0xc0] sm:$0xff]
    %v95 = vld [vmem:[#allocation5 + $0xc8] sm:$0xff]
    %v96 = vld [vmem:[#allocation5 + $0xd0] sm:$0xff]
    %v97 = vld [vmem:[#allocation5 + $0xd8] sm:$0xff]
    %v98 = vld [vmem:[#allocation5 + $0xe0] sm:$0xff]
    %v99 = vld [vmem:[#allocation5 + $0xe8] sm:$0xff]
    %v100 = vld [vmem:[#allocation5 + $0xf0] sm:$0xff]
    %v101 = vld [vmem:[#allocation5 + $0xf8] sm:$0xff]
    %v102 = vld [vmem:[%s2] sm:$0x3]
    %v104 = vperm.slane %v102, 0
    %v105 = vperm.slane %v102, 1
    %108 = vmatpush.msra.mxu0 %v100
    %109 = vmatpush.msra.mxu0 %v98
    %110 = vmatpush.msra.mxu0 %v96
    %111 = vmatpush.msra.mxu0 %v94
    %112 = vmatpush.msra.mxu0 %v92
    %113 = vmatpush.msra.mxu0 %v90
    %114 = vmatpush.msra.mxu0 %v88
    %115 = vmatpush.msra.mxu0 %v86
    %116 = vmatpush.msra.mxu0 %v84
    %117 = vmatpush.msra.mxu0 %v82
    %118 = vmatpush.msra.mxu0 %v80
    %119 = vmatpush.msra.mxu0 %v78
    %120 = vmatpush.msra.mxu0 %v76
    %121 = vmatpush.msra.mxu0 %v74
    %122 = vmatpush.msra.mxu0 %v72
    %123 = vmatpush.msra.mxu0 %v70
    %124 = vmatmul.f32.gmra.mxu0 %v68
    %v125 = vpop.f32.mrf.mxu0
    %v126 = vadd.f32 %v104, %v125
    %127 = vmatmul.f32.gmra.mxu0 %v69
    %v128 = vpop.f32.mrf.mxu0
    %v129 = vadd.f32 %v104, %v128
    %130 = vdwg.mxu0
    %131 = vmatpush.msra.mxu0 %v101
    %132 = vmatpush.msra.mxu0 %v99
    %133 = vmatpush.msra.mxu0 %v97
    %134 = vmatpush.msra.mxu0 %v95
    %135 = vmatpush.msra.mxu0 %v93
    %136 = vmatpush.msra.mxu0 %v91
    %137 = vmatpush.msra.mxu0 %v89
    %138 = vmatpush.msra.mxu0 %v87
    %139 = vmatpush.msra.mxu0 %v85
    %140 = vmatpush.msra.mxu0 %v83
    %141 = vmatpush.msra.mxu0 %v81
    %142 = vmatpush.msra.mxu0 %v79
    %143 = vmatpush.msra.mxu0 %v77
    %144 = vmatpush.msra.mxu0 %v75
    %145 = vmatpush.msra.mxu0 %v73
    %146 = vmatpush.msra.mxu0 %v71
    %147 = vmatmul.f32.gmra.mxu0 %v68
    %v148 = vpop.f32.mrf.mxu0
    %v149 = vadd.f32 %v105, %v148
    %150 = vmatmul.f32.gmra.mxu0 %v69
    %v151 = vpop.f32.mrf.mxu0
    %v152 = vadd.f32 %v105, %v151
    %153 = vdwg.mxu0
    %v154 = vmax.f32 %v126, 0.0
    %v155 = vmax.f32 %v149, 0.0
    %v156 = vmax.f32 %v129, 0.0
    %v157 = vmax.f32 %v152, 0.0
    %v158 = vld [vmem:[#allocation7] sm:$0xff]
    %v159 = vld [vmem:[#allocation7 + $0x8] sm:$0xff]
    %v160 = vld [vmem:[#allocation7 + $0x10] sm:$0xff]
    %v161 = vld [vmem:[#allocation7 + $0x18] sm:$0xff]
    %v162 = vld [vmem:[#allocation7 + $0x20] sm:$0xff]
    %v163 = vld [vmem:[#allocation7 + $0x28] sm:$0xff]
    %v164 = vld [vmem:[#allocation7 + $0x30] sm:$0xff]
    %v165 = vld [vmem:[#allocation7 + $0x38] sm:$0xff]
    %v166 = vld [vmem:[#allocation7 + $0x40] sm:$0xff]
    %v167 = vld [vmem:[#allocation7 + $0x48] sm:$0xff]
    %v168 = vld [vmem:[#allocation7 + $0x50] sm:$0xff]
    %v169 = vld [vmem:[#allocation7 + $0x58] sm:$0xff]
    %v170 = vld [vmem:[#allocation7 + $0x60] sm:$0xff]
    %v171 = vld [vmem:[#allocation7 + $0x68] sm:$0xff]
    %v172 = vld [vmem:[#allocation7 + $0x70] sm:$0xff]
    %v173 = vld [vmem:[#allocation7 + $0x78] sm:$0xff]
    %v174 = vld [vmem:[#allocation7 + $0x80] sm:$0xff]
    %v175 = vld [vmem:[#allocation7 + $0x88] sm:$0xff]
    %v176 = vld [vmem:[#allocation7 + $0x90] sm:$0xff]
    %v177 = vld [vmem:[#allocation7 + $0x98] sm:$0xff]
    %v178 = vld [vmem:[#allocation7 + $0xa0] sm:$0xff]
    %v179 = vld [vmem:[#allocation7 + $0xa8] sm:$0xff]
    %v180 = vld [vmem:[#allocation7 + $0xb0] sm:$0xff]
    %v181 = vld [vmem:[#allocation7 + $0xb8] sm:$0xff]
    %v182 = vld [vmem:[#allocation7 + $0xc0] sm:$0xff]
    %v183 = vld [vmem:[#allocation7 + $0xc8] sm:$0xff]
    %v184 = vld [vmem:[#allocation7 + $0xd0] sm:$0xff]
    %v185 = vld [vmem:[#allocation7 + $0xd8] sm:$0xff]
    %v186 = vld [vmem:[#allocation7 + $0xe0] sm:$0xff]
    %v187 = vld [vmem:[#allocation7 + $0xe8] sm:$0xff]
    %v188 = vld [vmem:[#allocation7 + $0xf0] sm:$0xff]
    %v189 = vld [vmem:[#allocation7 + $0xf8] sm:$0xff]
    %v190 = vld [vmem:[%s4] sm:$0x1]
    %v192 = vperm.slane %v190, 0
    %194 = vmatpush.msra.mxu0 %v173
    %195 = vmatpush.msra.mxu0 %v172
    %196 = vmatpush.msra.mxu0 %v171
    %197 = vmatpush.msra.mxu0 %v170
    %198 = vmatpush.msra.mxu0 %v169
    %199 = vmatpush.msra.mxu0 %v168
    %200 = vmatpush.msra.mxu0 %v167
    %201 = vmatpush.msra.mxu0 %v166
    %202 = vmatpush.msra.mxu0 %v165
    %203 = vmatpush.msra.mxu0 %v164
    %204 = vmatpush.msra.mxu0 %v163
    %205 = vmatpush.msra.mxu0 %v162
    %206 = vmatpush.msra.mxu0 %v161
    %207 = vmatpush.msra.mxu0 %v160
    %208 = vmatpush.msra.mxu0 %v159
    %209 = vmatpush.msra.mxu0 %v158
    %210 = vmatmul.f32.gmra.mxu0 %v154
    %v211 = vpop.f32.mrf.mxu0
    %v212 = vadd.f32 %v192, %v211
    %213 = vmatmul.f32.gmra.mxu0 %v156
    %v214 = vpop.f32.mrf.mxu0
    %v215 = vadd.f32 %v192, %v214
    %216 = vdwg.mxu0
    %217 = vmatpush.msra.mxu0 %v189
    %218 = vmatpush.msra.mxu0 %v188
    %219 = vmatpush.msra.mxu0 %v187
    %220 = vmatpush.msra.mxu0 %v186
    %221 = vmatpush.msra.mxu0 %v185
    %222 = vmatpush.msra.mxu0 %v184
    %223 = vmatpush.msra.mxu0 %v183
    %224 = vmatpush.msra.mxu0 %v182
    %225 = vmatpush.msra.mxu0 %v181
    %226 = vmatpush.msra.mxu0 %v180
    %227 = vmatpush.msra.mxu0 %v179
    %228 = vmatpush.msra.mxu0 %v178
    %229 = vmatpush.msra.mxu0 %v177
    %230 = vmatpush.msra.mxu0 %v176
    %231 = vmatpush.msra.mxu0 %v175
    %232 = vmatpush.msra.mxu0 %v174
    %233 = vmatmul.f32.gmra.mxu0 %v155
    %v234 = vpop.f32.mrf.mxu0
    %v235 = vadd.f32 %v212, %v234
    %236 = vmatmul.f32.gmra.mxu0 %v157
    %v237 = vpop.f32.mrf.mxu0
    %v238 = vadd.f32 %v215, %v237
    %239 = vdwg.mxu0
    %240 = vst [vmem:[#allocation8] sm:$0xff] %v235
    %241 = vst [vmem:[#allocation8 + $0x8] sm:$0xff] %v238
    // Predicated region
    $region34: #{mlp_forward.1} parent=1 // pred_check
      _
    $region35: #{mlp_forward.1} parent=1 // pred_check_branch
      %243 = sbr.rel (0) target = $region37
    $region36: #{mlp_forward.1} parent=1 // pred_region
      %245 = vsyncadd [#allocation4], 0
      %s246 = sshll.u32 [#allocation8], 4
      %s247 = int_to_ptr.vmem [resolvable:$true] %s246
      %s248 = sshll.u32 %s5, 4
      %s249 = int_to_ptr.hbm [resolvable:$true] %s248
      %254 = dma.vmem_to_hbm [thread:$0]  %s247, 256, %s249, [#allocation4], 128, 128, 8
    $region37: #{mlp_forward.1} parent=1 // pred_fallthru
      _
    // Predicated region
    $region38: #{mlp_forward.1} parent=1 // pred_check
      _
    $region39: #{mlp_forward.1} parent=1 // pred_check_branch
      %256 = sbr.rel (0) target = $region41
    $region40: #{mlp_forward.1} parent=1 // pred_region
      %258 = dma.done [#allocation4], 256
    $region41: #{mlp_forward.1} parent=1 // pred_fallthru
      _
    %259 = vsyncpa [#allocation3], 1
    %260 = vsyncpa [#allocation6], 1
    %261 = vsyncpa [#allocation4], 1

</llo_original>
